<compile_context>
chip_gen: v7x
topology: tpu7x:2x2x1
jax: 0.10.0
libtpu: 0.0.40
codegen_flags: <defaults>
</compile_context>

<pallas_src>
import numpy as np
import jax
import jax.numpy as jnp
from jax.experimental import pallas as pl
from jax.experimental.pallas import tpu as pltpu


def _identity_kernel(feat_ref, out_ref):
    # Whole-tile load/store; the entire "compute" of InstanceEncoder4.forward.
    out_ref[...] = feat_ref[...]


# Per-block byte budget.  With double-buffered input + output blocks the VMEM
# footprint is ~4x this, i.e. ~8 MiB -- comfortably under the 16 MiB scoped
# default on v5e and the 32 MiB scoped / 64 MiB physical VMEM on v7x.
_TILE_BYTES_BUDGET = 2 * 1024 * 1024


def _sublane_align(dtype):
    """Minimum sublane multiple so packed dtypes get full-width vld/vst."""
    itemsize = jnp.dtype(dtype).itemsize
    return (4 // itemsize) * 8  # f32 -> 8, bf16 -> 16, int8/fp8 -> 32


def instance_encoder4_forward(image_features, pred_instances,
                              pred_instance_box_features, training=True,
                              *, use_pallas_copy=True):
    """Mirrors InstanceEncoder4.forward.

    Returns (pred_instance_box_features, None, losses, metrics).  The feature
    tensor is routed through a lane-dense, input-output-aliased Pallas copy
    (or returned directly when use_pallas_copy=False).
    """
    del image_features, pred_instances, training  # unused by the reference module

    losses = {}
    metrics = {}
    feats = pred_instance_box_features

    if not use_pallas_copy:
        # Fastest possible: the reference op is a pure identity.
        return feats, None, losses, metrics

    n, c = feats.shape
    itemsize = jnp.dtype(feats.dtype).itemsize
    align = _sublane_align(feats.dtype)

    # Largest dtype-aligned row tile that fits the per-block budget; the lane
    # (feature) dim is always kept full for wide, unmasked stores.
    tile_n = max(align, (_TILE_BYTES_BUDGET // max(1, c * itemsize)) // align * align)

    if tile_n >= n:
        # Whole array in one block: block_shape == full array dims, so ragged
        # N (e.g. 100 instances) needs no padding and no divisibility checks.
        tile_n = n
        grid = (1,)
    else:
        # Ragged last block is masked by Pallas; tile_n stays dtype-aligned.
        grid = (pl.cdiv(n, tile_n),)

    out = pl.pallas_call(
        _identity_kernel,
        out_shape=jax.ShapeDtypeStruct((n, c), feats.dtype),
        grid_spec=pltpu.PrefetchScalarGridSpec(
            num_scalar_prefetch=0,
            grid=grid,
            in_specs=[pl.BlockSpec((tile_n, c), lambda i: (i, 0))],
            out_specs=pl.BlockSpec((tile_n, c), lambda i: (i, 0)),
        ),
        # Output aliases the input: no duplicate (N, C) HBM buffer / writeback
        # when the caller donates; closest analogue of PyTorch returning the
        # same tensor object.
        input_output_aliases={0: 0},
        compiler_params=pltpu.CompilerParams(
            dimension_semantics=("parallel",)),
    )(feats)

    # TODO(synk): reference forward returns None for the second output (no
    # instance-mask/context tensor is ever produced), so nothing to compute.
    return out, None, losses, metrics


if __name__ == "__main__":
    key = jax.random.PRNGKey(0)
    k_img, k_feat = jax.random.split(key)

    # Shapes consistent with the module's interface:
    #   image_features: NCHW backbone feature map (unused by forward)
    #   pred_instance_box_features: (instance_num, feature_dim); N=100 is the
    #   typical detectron2 instance count and is deliberately NOT a multiple
    #   of 8 to exercise the ragged path.
    image_features = jax.random.normal(k_img, (2, 4, 16, 16), dtype=jnp.float32)
    pred_instance_box_features = jax.random.normal(
        k_feat, (100, 1024), dtype=jnp.float32)
    pred_instances = None  # structured Instances object; carries no tensor math here

    # Snapshot on host before the call (the device input may be aliased to the
    # output buffer by the kernel).
    expected = jax.device_get(pred_instance_box_features)

    out, mask_out, losses, metrics = instance_encoder4_forward(
        image_features, pred_instances, pred_instance_box_features, training=True)
    out = jax.block_until_ready(out)

    assert mask_out is None
    assert losses == {} and metrics == {}
    assert out.shape == expected.shape
    assert out.dtype == expected.dtype
    assert np.array_equal(jax.device_get(out), expected)

    print("KERNEL_OK")
</pallas_src>

<mosaic_0001>
module attributes {stable_mosaic.version = 11 : i64} {
  func.func @_identity_kernel(%arg0: i32, %arg1: memref<100x1024xf32, #tpu.memory_space<vmem>>, %arg2: memref<100x1024xf32, #tpu.memory_space<vmem>>) attributes {dimension_semantics = [#tpu.dimension_semantics<parallel>], iteration_bounds = array<i64: 1>, scalar_prefetch = 0 : i64, scratch_operands = 0 : i64, tpu.core_type = #tpu.core_type<tc>, window_params = [{transform_indices = @transform_0, window_bounds = array<i64: 100, 1024>}, {transform_indices = @transform_1, window_bounds = array<i64: 100, 1024>}]} {
    %c0 = arith.constant 0 : index
    %c0_0 = arith.constant 0 : index
    %0 = vector.load %arg1[%c0, %c0_0] : memref<100x1024xf32, #tpu.memory_space<vmem>>, vector<100x1024xf32>
    %c0_1 = arith.constant 0 : index
    %c0_2 = arith.constant 0 : index
    %1 = vector.load %arg2[%c0_1, %c0_2] : memref<100x1024xf32, #tpu.memory_space<vmem>>, vector<100x1024xf32>
    tpu.vector_store %arg2[%c0_1, %c0_2], %0 {strides = array<i32>} : memref<100x1024xf32, #tpu.memory_space<vmem>>, vector<100x1024xf32>,
    return
  }
  func.func @transform_0(%arg0: i32) -> (i32, i32) {
    %c0_i32 = arith.constant 0 : i32
    %c0_i32_0 = arith.constant 0 : i32
    return %arg0, %c0_i32 : i32, i32
  }
  func.func @transform_1(%arg0: i32) -> (i32, i32) {
    %c0_i32 = arith.constant 0 : i32
    %c0_i32_0 = arith.constant 0 : i32
    return %arg0, %c0_i32 : i32, i32
  }
}

</mosaic_0001>

<llo_original>
// kernel: tpu_custom_call.1
$region0: #{tpu_custom_call.1}
  #allocation0 [shape = 'u32[]', space=smem, size = 0x4, offset = 0x4, fixed_abs, tag = 'smem constant byte address 0x4 - core index']
  #allocation1 [shape = 'u32[144,128]{1,0:T(1,128)}', space=vmem, size = 0x12000, scoped, tag = 'internal scratch']
  %s0 = inlined_call_operand.hbm [shape: f32[100,1024], index: 0, kind: input, shape index: {}, may-alias: {0,1}]
  %s1 = inlined_call_operand.hbm [shape: f32[100,1024], index: 1, kind: output, shape index: {}, may-alias: {0,1}]
  %s2 = sld [smem:[#allocation0]]
  $region18: #{tpu_custom_call.1} parent=0
    _
  %s4 = ssub.s32 1, %s2
  %s5 = scalar_select 0, %s4, %s2
  $region1: #{tpu_custom_call.1} parent=0
    #allocation2 [shape = 'u8[425984]{0}', space=vmem, size = 0x68000, scoped, tag = 'input window, operand 0, single buffered']
    #allocation3 [shape = 's32[1]{0}', space=sflag, size = 0x4, scoped, tag = 'scoped memory for tpu_custom_call.1']
    #allocation4 [shape = 's32[1]{0}', space=sflag, size = 0x4, scoped, tag = 'scoped memory for tpu_custom_call.1']
    #allocation5 [shape = 'u8[425984]{0}', space=vmem, size = 0x68000, scoped, tag = 'output window, operand 0, single buffered']
    %6 = vsyncpa [#allocation3], 0
    %7 = vsyncpa [#allocation4], 0
    // Predicated region
    $region2: #{tpu_custom_call.1} parent=1 // pred_check
      _
    $region3: #{tpu_custom_call.1} parent=1 // pred_check_branch
      %9 = sbr.rel (0) target = $region5
    $region4: #{tpu_custom_call.1} parent=1 // pred_region
      %s11 = ssub.s32 13312, 13312
      %12 = vsyncadd [#allocation3], %s11
      %s13 = sshll.u32 [#allocation2], 4
      %s14 = int_to_ptr.vmem [resolvable:$true] %s13
      %19 = dma.hbm_to_vmem [thread:$0]  %s0, 13312, %s14, [#allocation3], 1024, 1024, 64
    $region5: #{tpu_custom_call.1} parent=1 // pred_fallthru
      _
    // Predicated region
    $region6: #{tpu_custom_call.1} parent=1 // pred_check
      _
    $region7: #{tpu_custom_call.1} parent=1 // pred_check_branch
      %21 = sbr.rel (0) target = $region9
    $region8: #{tpu_custom_call.1} parent=1 // pred_region
      %22 = dma.done [#allocation3], 13312
    $region9: #{tpu_custom_call.1} parent=1 // pred_fallthru
      _
    %v23 = vld [vmem:[#allocation2] sm:$0xff]
    %v24 = vld [vmem:[#allocation2 + $0x8] sm:$0xff]
    %v25 = vld [vmem:[#allocation2 + $0x10] sm:$0xff]
    %v26 = vld [vmem:[#allocation2 + $0x18] sm:$0xff]
    %v27 = vld [vmem:[#allocation2 + $0x20] sm:$0xff]
    %v28 = vld [vmem:[#allocation2 + $0x28] sm:$0xff]
    %v29 = vld [vmem:[#allocation2 + $0x30] sm:$0xff]
    %v30 = vld [vmem:[#allocation2 + $0x38] sm:$0xff]
    %v31 = vld [vmem:[#allocation2 + $0x40] sm:$0xff]
    %v32 = vld [vmem:[#allocation2 + $0x48] sm:$0xff]
    %v33 = vld [vmem:[#allocation2 + $0x50] sm:$0xff]
    %v34 = vld [vmem:[#allocation2 + $0x58] sm:$0xff]
    %v35 = vld [vmem:[#allocation2 + $0x60] sm:$0xff]
    %v36 = vld [vmem:[#allocation2 + $0x68] sm:$0xff]
    %v37 = vld [vmem:[#allocation2 + $0x70] sm:$0xff]
    %v38 = vld [vmem:[#allocation2 + $0x78] sm:$0xff]
    %v39 = vld [vmem:[#allocation2 + $0x80] sm:$0xff]
    %v40 = vld [vmem:[#allocation2 + $0x88] sm:$0xff]
    %v41 = vld [vmem:[#allocation2 + $0x90] sm:$0xff]
    %v42 = vld [vmem:[#allocation2 + $0x98] sm:$0xff]
    %v43 = vld [vmem:[#allocation2 + $0xa0] sm:$0xff]
    %v44 = vld [vmem:[#allocation2 + $0xa8] sm:$0xff]
    %v45 = vld [vmem:[#allocation2 + $0xb0] sm:$0xff]
    %v46 = vld [vmem:[#allocation2 + $0xb8] sm:$0xff]
    %v47 = vld [vmem:[#allocation2 + $0xc0] sm:$0xff]
    %v48 = vld [vmem:[#allocation2 + $0xc8] sm:$0xff]
    %v49 = vld [vmem:[#allocation2 + $0xd0] sm:$0xff]
    %v50 = vld [vmem:[#allocation2 + $0xd8] sm:$0xff]
    %v51 = vld [vmem:[#allocation2 + $0xe0] sm:$0xff]
    %v52 = vld [vmem:[#allocation2 + $0xe8] sm:$0xff]
    %v53 = vld [vmem:[#allocation2 + $0xf0] sm:$0xff]
    %v54 = vld [vmem:[#allocation2 + $0xf8] sm:$0xff]
    %v55 = vld [vmem:[#allocation2 + $0x100] sm:$0xff]
    %v56 = vld [vmem:[#allocation2 + $0x108] sm:$0xff]
    %v57 = vld [vmem:[#allocation2 + $0x110] sm:$0xff]
    %v58 = vld [vmem:[#allocation2 + $0x118] sm:$0xff]
    %v59 = vld [vmem:[#allocation2 + $0x120] sm:$0xff]
    %v60 = vld [vmem:[#allocation2 + $0x128] sm:$0xff]
    %v61 = vld [vmem:[#allocation2 + $0x130] sm:$0xff]
    %v62 = vld [vmem:[#allocation2 + $0x138] sm:$0xff]
    %v63 = vld [vmem:[#allocation2 + $0x140] sm:$0xff]
    %v64 = vld [vmem:[#allocation2 + $0x148] sm:$0xff]
    %v65 = vld [vmem:[#allocation2 + $0x150] sm:$0xff]
    %v66 = vld [vmem:[#allocation2 + $0x158] sm:$0xff]
    %v67 = vld [vmem:[#allocation2 + $0x160] sm:$0xff]
    %v68 = vld [vmem:[#allocation2 + $0x168] sm:$0xff]
    %v69 = vld [vmem:[#allocation2 + $0x170] sm:$0xff]
    %v70 = vld [vmem:[#allocation2 + $0x178] sm:$0xff]
    %v71 = vld [vmem:[#allocation2 + $0x180] sm:$0xff]
    %v72 = vld [vmem:[#allocation2 + $0x188] sm:$0xff]
    %v73 = vld [vmem:[#allocation2 + $0x190] sm:$0xff]
    %v74 = vld [vmem:[#allocation2 + $0x198] sm:$0xff]
    %v75 = vld [vmem:[#allocation2 + $0x1a0] sm:$0xff]
    %v76 = vld [vmem:[#allocation2 + $0x1a8] sm:$0xff]
    %v77 = vld [vmem:[#allocation2 + $0x1b0] sm:$0xff]
    %v78 = vld [vmem:[#allocation2 + $0x1b8] sm:$0xff]
    %v79 = vld [vmem:[#allocation2 + $0x1c0] sm:$0xff]
    %v80 = vld [vmem:[#allocation2 + $0x1c8] sm:$0xff]
    %v81 = vld [vmem:[#allocation2 + $0x1d0] sm:$0xff]
    %v82 = vld [vmem:[#allocation2 + $0x1d8] sm:$0xff]
    %v83 = vld [vmem:[#allocation2 + $0x1e0] sm:$0xff]
    %v84 = vld [vmem:[#allocation2 + $0x1e8] sm:$0xff]
    %v85 = vld [vmem:[#allocation2 + $0x1f0] sm:$0xff]
    %v86 = vld [vmem:[#allocation2 + $0x1f8] sm:$0xff]
    %v87 = vld [vmem:[#allocation2 + $0x200] sm:$0xff]
    %v88 = vld [vmem:[#allocation2 + $0x208] sm:$0xff]
    %v89 = vld [vmem:[#allocation2 + $0x210] sm:$0xff]
    %v90 = vld [vmem:[#allocation2 + $0x218] sm:$0xff]
    %v91 = vld [vmem:[#allocation2 + $0x220] sm:$0xff]
    %v92 = vld [vmem:[#allocation2 + $0x228] sm:$0xff]
    %v93 = vld [vmem:[#allocation2 + $0x230] sm:$0xff]
    %v94 = vld [vmem:[#allocation2 + $0x238] sm:$0xff]
    %v95 = vld [vmem:[#allocation2 + $0x240] sm:$0xff]
    %v96 = vld [vmem:[#allocation2 + $0x248] sm:$0xff]
    %v97 = vld [vmem:[#allocation2 + $0x250] sm:$0xff]
    %v98 = vld [vmem:[#allocation2 + $0x258] sm:$0xff]
    %v99 = vld [vmem:[#allocation2 + $0x260] sm:$0xff]
    %v100 = vld [vmem:[#allocation2 + $0x268] sm:$0xff]
    %v101 = vld [vmem:[#allocation2 + $0x270] sm:$0xff]
    %v102 = vld [vmem:[#allocation2 + $0x278] sm:$0xff]
    %v103 = vld [vmem:[#allocation2 + $0x280] sm:$0xff]
    %v104 = vld [vmem:[#allocation2 + $0x288] sm:$0xff]
    %v105 = vld [vmem:[#allocation2 + $0x290] sm:$0xff]
    %v106 = vld [vmem:[#allocation2 + $0x298] sm:$0xff]
    %v107 = vld [vmem:[#allocation2 + $0x2a0] sm:$0xff]
    %v108 = vld [vmem:[#allocation2 + $0x2a8] sm:$0xff]
    %v109 = vld [vmem:[#allocation2 + $0x2b0] sm:$0xff]
    %v110 = vld [vmem:[#allocation2 + $0x2b8] sm:$0xff]
    %v111 = vld [vmem:[#allocation2 + $0x2c0] sm:$0xff]
    %v112 = vld [vmem:[#allocation2 + $0x2c8] sm:$0xff]
    %v113 = vld [vmem:[#allocation2 + $0x2d0] sm:$0xff]
    %v114 = vld [vmem:[#allocation2 + $0x2d8] sm:$0xff]
    %v115 = vld [vmem:[#allocation2 + $0x2e0] sm:$0xff]
    %v116 = vld [vmem:[#allocation2 + $0x2e8] sm:$0xff]
    %v117 = vld [vmem:[#allocation2 + $0x2f0] sm:$0xff]
    %v118 = vld [vmem:[#allocation2 + $0x2f8] sm:$0xff]
    %v119 = vld [vmem:[#allocation2 + $0x300] sm:$0xf]
    %v120 = vld [vmem:[#allocation2 + $0x308] sm:$0xf]
    %v121 = vld [vmem:[#allocation2 + $0x310] sm:$0xf]
    %v122 = vld [vmem:[#allocation2 + $0x318] sm:$0xf]
    %v123 = vld [vmem:[#allocation2 + $0x320] sm:$0xf]
    %v124 = vld [vmem:[#allocation2 + $0x328] sm:$0xf]
    %v125 = vld [vmem:[#allocation2 + $0x330] sm:$0xf]
    %v126 = vld [vmem:[#allocation2 + $0x338] sm:$0xf]
    %127 = vst [vmem:[#allocation5] sm:$0xff] %v23
    %128 = vst [vmem:[#allocation5 + $0x8] sm:$0xff] %v24
    %129 = vst [vmem:[#allocation5 + $0x10] sm:$0xff] %v25
    %130 = vst [vmem:[#allocation5 + $0x18] sm:$0xff] %v26
    %131 = vst [vmem:[#allocation5 + $0x20] sm:$0xff] %v27
    %132 = vst [vmem:[#allocation5 + $0x28] sm:$0xff] %v28
    %133 = vst [vmem:[#allocation5 + $0x30] sm:$0xff] %v29
    %134 = vst [vmem:[#allocation5 + $0x38] sm:$0xff] %v30
    %135 = vst [vmem:[#allocation5 + $0x40] sm:$0xff] %v31
    %136 = vst [vmem:[#allocation5 + $0x48] sm:$0xff] %v32
    %137 = vst [vmem:[#allocation5 + $0x50] sm:$0xff] %v33
    %138 = vst [vmem:[#allocation5 + $0x58] sm:$0xff] %v34
    %139 = vst [vmem:[#allocation5 + $0x60] sm:$0xff] %v35
    %140 = vst [vmem:[#allocation5 + $0x68] sm:$0xff] %v36
    %141 = vst [vmem:[#allocation5 + $0x70] sm:$0xff] %v37
    %142 = vst [vmem:[#allocation5 + $0x78] sm:$0xff] %v38
    %143 = vst [vmem:[#allocation5 + $0x80] sm:$0xff] %v39
    %144 = vst [vmem:[#allocation5 + $0x88] sm:$0xff] %v40
    %145 = vst [vmem:[#allocation5 + $0x90] sm:$0xff] %v41
    %146 = vst [vmem:[#allocation5 + $0x98] sm:$0xff] %v42
    %147 = vst [vmem:[#allocation5 + $0xa0] sm:$0xff] %v43
    %148 = vst [vmem:[#allocation5 + $0xa8] sm:$0xff] %v44
    %149 = vst [vmem:[#allocation5 + $0xb0] sm:$0xff] %v45
    %150 = vst [vmem:[#allocation5 + $0xb8] sm:$0xff] %v46
    %151 = vst [vmem:[#allocation5 + $0xc0] sm:$0xff] %v47
    %152 = vst [vmem:[#allocation5 + $0xc8] sm:$0xff] %v48
    %153 = vst [vmem:[#allocation5 + $0xd0] sm:$0xff] %v49
    %154 = vst [vmem:[#allocation5 + $0xd8] sm:$0xff] %v50
    %155 = vst [vmem:[#allocation5 + $0xe0] sm:$0xff] %v51
    %156 = vst [vmem:[#allocation5 + $0xe8] sm:$0xff] %v52
    %157 = vst [vmem:[#allocation5 + $0xf0] sm:$0xff] %v53
    %158 = vst [vmem:[#allocation5 + $0xf8] sm:$0xff] %v54
    %159 = vst [vmem:[#allocation5 + $0x100] sm:$0xff] %v55
    %160 = vst [vmem:[#allocation5 + $0x108] sm:$0xff] %v56
    %161 = vst [vmem:[#allocation5 + $0x110] sm:$0xff] %v57
    %162 = vst [vmem:[#allocation5 + $0x118] sm:$0xff] %v58
    %163 = vst [vmem:[#allocation5 + $0x120] sm:$0xff] %v59
    %164 = vst [vmem:[#allocation5 + $0x128] sm:$0xff] %v60
    %165 = vst [vmem:[#allocation5 + $0x130] sm:$0xff] %v61
    %166 = vst [vmem:[#allocation5 + $0x138] sm:$0xff] %v62
    %167 = vst [vmem:[#allocation5 + $0x140] sm:$0xff] %v63
    %168 = vst [vmem:[#allocation5 + $0x148] sm:$0xff] %v64
    %169 = vst [vmem:[#allocation5 + $0x150] sm:$0xff] %v65
    %170 = vst [vmem:[#allocation5 + $0x158] sm:$0xff] %v66
    %171 = vst [vmem:[#allocation5 + $0x160] sm:$0xff] %v67
    %172 = vst [vmem:[#allocation5 + $0x168] sm:$0xff] %v68
    %173 = vst [vmem:[#allocation5 + $0x170] sm:$0xff] %v69
    %174 = vst [vmem:[#allocation5 + $0x178] sm:$0xff] %v70
    %175 = vst [vmem:[#allocation5 + $0x180] sm:$0xff] %v71
    %176 = vst [vmem:[#allocation5 + $0x188] sm:$0xff] %v72
    %177 = vst [vmem:[#allocation5 + $0x190] sm:$0xff] %v73
    %178 = vst [vmem:[#allocation5 + $0x198] sm:$0xff] %v74
    %179 = vst [vmem:[#allocation5 + $0x1a0] sm:$0xff] %v75
    %180 = vst [vmem:[#allocation5 + $0x1a8] sm:$0xff] %v76
    %181 = vst [vmem:[#allocation5 + $0x1b0] sm:$0xff] %v77
    %182 = vst [vmem:[#allocation5 + $0x1b8] sm:$0xff] %v78
    %183 = vst [vmem:[#allocation5 + $0x1c0] sm:$0xff] %v79
    %184 = vst [vmem:[#allocation5 + $0x1c8] sm:$0xff] %v80
    %185 = vst [vmem:[#allocation5 + $0x1d0] sm:$0xff] %v81
    %186 = vst [vmem:[#allocation5 + $0x1d8] sm:$0xff] %v82
    %187 = vst [vmem:[#allocation5 + $0x1e0] sm:$0xff] %v83
    %188 = vst [vmem:[#allocation5 + $0x1e8] sm:$0xff] %v84
    %189 = vst [vmem:[#allocation5 + $0x1f0] sm:$0xff] %v85
    %190 = vst [vmem:[#allocation5 + $0x1f8] sm:$0xff] %v86
    %191 = vst [vmem:[#allocation5 + $0x200] sm:$0xff] %v87
    %192 = vst [vmem:[#allocation5 + $0x208] sm:$0xff] %v88
    %193 = vst [vmem:[#allocation5 + $0x210] sm:$0xff] %v89
    %194 = vst [vmem:[#allocation5 + $0x218] sm:$0xff] %v90
    %195 = vst [vmem:[#allocation5 + $0x220] sm:$0xff] %v91
    %196 = vst [vmem:[#allocation5 + $0x228] sm:$0xff] %v92
    %197 = vst [vmem:[#allocation5 + $0x230] sm:$0xff] %v93
    %198 = vst [vmem:[#allocation5 + $0x238] sm:$0xff] %v94
    %199 = vst [vmem:[#allocation5 + $0x240] sm:$0xff] %v95
    %200 = vst [vmem:[#allocation5 + $0x248] sm:$0xff] %v96
    %201 = vst [vmem:[#allocation5 + $0x250] sm:$0xff] %v97
    %202 = vst [vmem:[#allocation5 + $0x258] sm:$0xff] %v98
    %203 = vst [vmem:[#allocation5 + $0x260] sm:$0xff] %v99
    %204 = vst [vmem:[#allocation5 + $0x268] sm:$0xff] %v100
    %205 = vst [vmem:[#allocation5 + $0x270] sm:$0xff] %v101
    %206 = vst [vmem:[#allocation5 + $0x278] sm:$0xff] %v102
    %207 = vst [vmem:[#allocation5 + $0x280] sm:$0xff] %v103
    %208 = vst [vmem:[#allocation5 + $0x288] sm:$0xff] %v104
    %209 = vst [vmem:[#allocation5 + $0x290] sm:$0xff] %v105
    %210 = vst [vmem:[#allocation5 + $0x298] sm:$0xff] %v106
    %211 = vst [vmem:[#allocation5 + $0x2a0] sm:$0xff] %v107
    %212 = vst [vmem:[#allocation5 + $0x2a8] sm:$0xff] %v108
    %213 = vst [vmem:[#allocation5 + $0x2b0] sm:$0xff] %v109
    %214 = vst [vmem:[#allocation5 + $0x2b8] sm:$0xff] %v110
    %215 = vst [vmem:[#allocation5 + $0x2c0] sm:$0xff] %v111
    %216 = vst [vmem:[#allocation5 + $0x2c8] sm:$0xff] %v112
    %217 = vst [vmem:[#allocation5 + $0x2d0] sm:$0xff] %v113
    %218 = vst [vmem:[#allocation5 + $0x2d8] sm:$0xff] %v114
    %219 = vst [vmem:[#allocation5 + $0x2e0] sm:$0xff] %v115
    %220 = vst [vmem:[#allocation5 + $0x2e8] sm:$0xff] %v116
    %221 = vst [vmem:[#allocation5 + $0x2f0] sm:$0xff] %v117
    %222 = vst [vmem:[#allocation5 + $0x2f8] sm:$0xff] %v118
    %223 = vst [vmem:[#allocation5 + $0x300] sm:$0xf] %v119
    %224 = vst [vmem:[#allocation5 + $0x308] sm:$0xf] %v120
    %225 = vst [vmem:[#allocation5 + $0x310] sm:$0xf] %v121
    %226 = vst [vmem:[#allocation5 + $0x318] sm:$0xf] %v122
    %227 = vst [vmem:[#allocation5 + $0x320] sm:$0xf] %v123
    %228 = vst [vmem:[#allocation5 + $0x328] sm:$0xf] %v124
    %229 = vst [vmem:[#allocation5 + $0x330] sm:$0xf] %v125
    %230 = vst [vmem:[#allocation5 + $0x338] sm:$0xf] %v126
    // Predicated region
    $region10: #{tpu_custom_call.1} parent=1 // pred_check
      _
    $region11: #{tpu_custom_call.1} parent=1 // pred_check_branch
      %232 = sbr.rel (0) target = $region13
    $region12: #{tpu_custom_call.1} parent=1 // pred_region
      %s234 = ssub.s32 13312, 13312
      %235 = vsyncadd [#allocation4], %s234
      %s236 = sshll.u32 [#allocation5], 4
      %s237 = int_to_ptr.vmem [resolvable:$true] %s236
      %242 = dma.vmem_to_hbm [thread:$0]  %s237, 13312, %s1, [#allocation4], 1024, 1024, 64
    $region13: #{tpu_custom_call.1} parent=1 // pred_fallthru
      _
    // Predicated region
    $region14: #{tpu_custom_call.1} parent=1 // pred_check
      _
    $region15: #{tpu_custom_call.1} parent=1 // pred_check_branch
      %244 = sbr.rel (0) target = $region17
    $region16: #{tpu_custom_call.1} parent=1 // pred_region
      %245 = dma.done [#allocation4], 13312
    $region17: #{tpu_custom_call.1} parent=1 // pred_fallthru
      _
    %246 = vsyncpa [#allocation3], 1
    %247 = vsyncpa [#allocation4], 1

</llo_original>
